<compile_context>
chip_gen: v7x
topology: tpu7x:2x2x1
jax: 0.10.0
libtpu: 0.0.40
codegen_flags: <defaults>
</compile_context>

<pallas_src>
import math
import functools

import jax
import jax.numpy as jnp
from jax.experimental import pallas as pl
from jax.experimental.pallas import tpu as pltpu


NUM_SUMS = 14                 # partial reductions produced by the dense kernel
OUT_ROWS = NUM_SUMS * 8       # one (8,128) accumulator slab per reduction
LANES = 128


# ----------------------------------------------------------------------------
# Pallas kernel: dense per-cell decode + masked partial reductions
# ----------------------------------------------------------------------------
def _yolo_loss_kernel(pred_ref, aux_ref, out_ref, *, inv_2stride, tile_r):
    """pred_ref: (5, tile_r, 128)  raw prediction channels (x, y, w, h, conf)
    aux_ref : (10, tile_r, 128) dxc, dyc, rsw, tw, rsh, th, obj, noobj, cmask, iou
    out_ref : (OUT_ROWS, 128)   resident accumulator (squeezed per-core block)
    """
    @pl.when(pl.program_id(1) == 0)
    def _():
        out_ref[...] = jnp.zeros_like(out_ref)

    zero = jnp.zeros((8, LANES), jnp.float32)
    acc = [zero] * NUM_SUMS

    # (8,128) sublane stripes: every load / temporary is one vreg, so the live
    # set (14 accumulators + ~15 stripe temps) fits inside the 64-vreg file.
    for r in range(0, tile_r, 8):
        obj = aux_ref[6, r:r + 8, :]
        noobj = aux_ref[7, r:r + 8, :]
        acc[0] = acc[0] + obj                      # n_obj
        acc[1] = acc[1] + noobj                    # n_noobj

        # x / y: err = pred/(2*stride) + ((0.5 - grid)/2 - t)
        px = pred_ref[0, r:r + 8, :]
        ex = px * inv_2stride + aux_ref[0, r:r + 8, :]
        acc[2] = acc[2] + obj * ex * ex            # sse_x
        py = pred_ref[1, r:r + 8, :]
        ey = py * inv_2stride + aux_ref[1, r:r + 8, :]
        acc[3] = acc[3] + obj * ey * ey            # sse_y

        # w / h: err = sqrt(pred) * 0.5/sqrt(anchor) - t.  Select-guard non-obj
        # cells BEFORE sqrt so zero padding / negative junk never makes NaN*0.
        pw = jnp.where(obj > 0.0, pred_ref[2, r:r + 8, :], 1.0)
        ew = jnp.sqrt(pw) * aux_ref[2, r:r + 8, :] - aux_ref[3, r:r + 8, :]
        acc[4] = acc[4] + obj * ew * ew            # sse_w
        ph = jnp.where(obj > 0.0, pred_ref[3, r:r + 8, :], 1.0)
        eh = jnp.sqrt(ph) * aux_ref[4, r:r + 8, :] - aux_ref[5, r:r + 8, :]
        acc[5] = acc[5] + obj * eh * eh            # sse_h

        # objectness BCE with constant targets (1 / 0): one clamped log each,
        # computed on mask-selected values (exact mask-then-compute semantics).
        pconf = pred_ref[4, r:r + 8, :]
        pc_o = jnp.where(obj > 0.0, pconf, 0.5)
        pc_n = jnp.where(noobj > 0.0, pconf, 0.5)
        acc[6] = acc[6] + obj * (-jnp.maximum(jnp.log(pc_o), -100.0))
        acc[7] = acc[7] + noobj * (-jnp.maximum(jnp.log(1.0 - pc_n), -100.0))

        cmask = aux_ref[8, r:r + 8, :]
        acc[8] = acc[8] + obj * cmask              # cls_acc numerator
        acc[9] = acc[9] + obj * pconf              # conf_obj numerator
        acc[10] = acc[10] + noobj * pconf          # conf_noobj numerator

        conf50 = (pconf > 0.5).astype(jnp.float32)
        acc[11] = acc[11] + conf50                 # precision denominator
        det = conf50 * cmask
        iou = aux_ref[9, r:r + 8, :]
        acc[12] = acc[12] + jnp.where(iou > 0.5, det, 0.0)    # recall50/prec num
        acc[13] = acc[13] + jnp.where(iou > 0.75, det, 0.0)   # recall75 num

    for k in range(NUM_SUMS):
        out_ref[k * 8:(k + 1) * 8, :] += acc[k]


# ----------------------------------------------------------------------------
# build_targets (plain-JAX glue: sparse per-ground-truth scatters)
# ----------------------------------------------------------------------------
def _bbox_wh_iou(anchor_wh, gwh):
    w1, h1 = anchor_wh[0], anchor_wh[1]
    w2, h2 = gwh[:, 0], gwh[:, 1]
    inter = jnp.minimum(w1, w2) * jnp.minimum(h1, h2)
    union = (w1 * h1 + 1e-16) + w2 * h2 - inter
    return inter / union


def _bbox_iou_xywh(box1, box2):
    # PyTorch-YOLOv3 bbox_iou with x1y1x2y2=False (includes the +1 convention)
    b1_x1 = box1[:, 0] - box1[:, 2] / 2
    b1_x2 = box1[:, 0] + box1[:, 2] / 2
    b1_y1 = box1[:, 1] - box1[:, 3] / 2
    b1_y2 = box1[:, 1] + box1[:, 3] / 2
    b2_x1 = box2[:, 0] - box2[:, 2] / 2
    b2_x2 = box2[:, 0] + box2[:, 2] / 2
    b2_y1 = box2[:, 1] - box2[:, 3] / 2
    b2_y2 = box2[:, 1] + box2[:, 3] / 2
    ix1 = jnp.maximum(b1_x1, b2_x1)
    iy1 = jnp.maximum(b1_y1, b2_y1)
    ix2 = jnp.minimum(b1_x2, b2_x2)
    iy2 = jnp.minimum(b1_y2, b2_y2)
    inter = jnp.clip(ix2 - ix1 + 1, 0, None) * jnp.clip(iy2 - iy1 + 1, 0, None)
    area1 = (b1_x2 - b1_x1 + 1) * (b1_y2 - b1_y1 + 1)
    area2 = (b2_x2 - b2_x1 + 1) * (b2_y2 - b2_y1 + 1)
    return inter / (area1 + area2 - inter + 1e-16)


def build_targets_jax(pred_boxes, pred_cls, target, anchors, ignore_thres):
    nB, nA, nG = pred_boxes.shape[0], pred_boxes.shape[1], pred_boxes.shape[2]

    obj_mask = jnp.zeros((nB, nA, nG, nG), jnp.float32)
    noobj_mask = jnp.ones((nB, nA, nG, nG), jnp.float32)
    class_mask = jnp.zeros((nB, nA, nG, nG), jnp.float32)
    iou_scores = jnp.zeros((nB, nA, nG, nG), jnp.float32)
    tx = jnp.zeros((nB, nA, nG, nG), jnp.float32)
    ty = jnp.zeros_like(tx)
    tw = jnp.zeros_like(tx)
    th = jnp.zeros_like(tx)

    target_boxes = target[:, 2:6] * nG
    gxy = target_boxes[:, :2]
    gwh = target_boxes[:, 2:]

    ious = jnp.stack([_bbox_wh_iou(anchors[a], gwh) for a in range(anchors.shape[0])])
    best_n = jnp.argmax(ious, axis=0)

    b = target[:, 0].astype(jnp.int32)
    labels = target[:, 1].astype(jnp.int32)
    gx, gy = gxy[:, 0], gxy[:, 1]
    gw, gh = gwh[:, 0], gwh[:, 1]
    gi = jnp.clip(gx.astype(jnp.int32), 0, nG - 1)
    gj = jnp.clip(gy.astype(jnp.int32), 0, nG - 1)

    ones = jnp.ones_like(gx)
    obj_mask = obj_mask.at[b, best_n, gj, gi].max(ones)
    noobj_mask = noobj_mask.at[b, best_n, gj, gi].min(0.0 * ones)

    # zero noobj wherever any anchor's wh-IoU with this gt exceeds the threshold
    anchor_idx = jnp.arange(anchors.shape[0])[None, :]
    over = (ious.T > ignore_thres).astype(jnp.float32)            # (nT, nA)
    noobj_mask = noobj_mask.at[b[:, None], anchor_idx, gj[:, None], gi[:, None]].min(1.0 - over)

    # NOTE: duplicate (b, best_n, gj, gi) collisions resolve in unspecified order,
    # same caveat as PyTorch advanced indexing on GPU.
    tx = tx.at[b, best_n, gj, gi].set(gx - jnp.floor(gx))
    ty = ty.at[b, best_n, gj, gi].set((gy - jnp.floor(gy) + 0.5) / 2.0)
    tw = tw.at[b, best_n, gj, gi].set(jnp.sqrt(gw / anchors[best_n, 0]) / 2.0)
    th = th.at[b, best_n, gj, gi].set(jnp.sqrt(gh / anchors[best_n, 1]) / 2.0)

    pred_cls_g = pred_cls[b, best_n, gj, gi]                      # (nT, nC)
    class_mask = class_mask.at[b, best_n, gj, gi].set(
        (jnp.argmax(pred_cls_g, axis=-1) == labels).astype(jnp.float32))
    # NOTE: this module (loss35.py) passes the RAW prediction[...,0:4] to
    # build_targets (pred_w/pred_h are re-bound, not written back), so the IoU
    # metrics intentionally use the raw boxes here as well.
    iou_scores = iou_scores.at[b, best_n, gj, gi].set(
        _bbox_iou_xywh(pred_boxes[b, best_n, gj, gi], target_boxes))

    return (iou_scores, class_mask, obj_mask, noobj_mask, tx, ty, tw, th,
            pred_cls_g, b, best_n, gj, gi, labels)


def _sparse_class_bce_sum(pred_cls_g, b, best_n, gj, gi, labels, nA, nG):
    """Sum of per-class BCE over the UNIQUE obj-assigned cells (exact replica of
    bce_loss(pred_cls[obj==1], tcls[obj==1]) numerator, incl. duplicate targets)."""
    nT = pred_cls_g.shape[0]
    cell = ((b * nA + best_n) * nG + gj) * nG + gi                # (nT,)
    t = jnp.arange(nT)
    earlier = t[None, :] < t[:, None]
    same_cell = cell[:, None] == cell[None, :]
    first_cell = 1.0 - jnp.any(same_cell & earlier, axis=1).astype(jnp.float32)
    same_cl = same_cell & (labels[:, None] == labels[None, :])
    first_cl = 1.0 - jnp.any(same_cl & earlier, axis=1).astype(jnp.float32)

    log_p = jnp.maximum(jnp.log(pred_cls_g), -100.0)              # (nT, C)
    log_1mp = jnp.maximum(jnp.log(1.0 - pred_cls_g), -100.0)
    base = -jnp.sum(log_1mp, axis=1)                              # all-zeros target
    corr = jnp.take_along_axis(log_1mp - log_p, labels[:, None], axis=1)[:, 0]
    return jnp.sum(first_cell * base + first_cl * corr)


# ----------------------------------------------------------------------------
# Jitted forward: build_targets + packing + Pallas kernel + loss assembly
# ----------------------------------------------------------------------------
def _yolo_forward(pred, targets, anchors, *, num_classes, img_dim, ignore_thres,
                  lambda_xy, lambda_wh, lambda_conf, lambda_cls):
    B = pred.shape[0]
    A = anchors.shape[0]
    C = num_classes
    Cp = C + 5
    G = int(math.sqrt(pred.shape[2] / A))
    stride = img_dim / G

    # loss35.py uses a plain .view (no permute): row-major reinterpretation.
    prediction = jnp.reshape(pred, (B, A, G, G, Cp))
    pred_boxes = prediction[..., 0:4]          # raw, as in the reference module
    pred_cls = prediction[..., 5:]

    scaled_anchors = anchors / stride
    (iou_scores, class_mask, obj_mask, noobj_mask, tx, ty, tw, th,
     pred_cls_g, tb, ta, tgj, tgi, labels) = build_targets_jax(
        pred_boxes, pred_cls, targets, scaled_anchors, ignore_thres)

    # sparse class BCE over obj-assigned cells (replaces 2C dense channels)
    loss_cls_sum = _sparse_class_bce_sum(pred_cls_g, tb, ta, tgj, tgi, labels, A, G)

    # folded per-cell constants (grid offsets merged with targets, anchors as rsqrt)
    gxv = jnp.arange(G, dtype=jnp.float32)[None, None, None, :]
    gyv = jnp.arange(G, dtype=jnp.float32)[None, None, :, None]
    dxc = (0.5 - gxv) * 0.5 - tx
    dyc = (0.5 - gyv) * 0.5 - ty
    rsw = jnp.broadcast_to((0.5 / jnp.sqrt(anchors[:, 0]))[None, :, None, None],
                           (B, A, G, G))
    rsh = jnp.broadcast_to((0.5 / jnp.sqrt(anchors[:, 1]))[None, :, None, None],
                           (B, A, G, G))

    # ---- two channel-major slabs (no concatenate, only 5 pred channels moved) ----
    # TODO(synk): bf16 transport would halve HBM bytes on v6e/v7x; kept f32 to
    # preserve reference numerics exactly (and v5e has no bf16 VPU).
    N = B * A * G * G
    pred5 = jnp.moveaxis(prediction[..., 0:5], -1, 0).reshape(5, N).astype(jnp.float32)
    aux = jnp.stack([dxc, dyc, rsw, tw, rsh, th,
                     obj_mask, noobj_mask, class_mask, iou_scores],
                    axis=0).reshape(10, N).astype(jnp.float32)

    # ---- tile the flattened cell axis as lane-dense (rows, 128) slabs ----
    R = -(-N // LANES)
    R8 = -(-R // 8) * 8
    tile_r = min(256, R8)                 # up to 32768 cells / grid step
    n_tiles = -(-R8 // tile_r)
    n_cores = 2 if n_tiles >= 2 else 1    # megacore split only if each TC gets a tile
    tiles_per_core = -(-n_tiles // n_cores)
    R_pad = n_cores * tiles_per_core * tile_r
    N_pad = R_pad * LANES
    if N_pad != N:
        pred5 = jnp.pad(pred5, ((0, 0), (0, N_pad - N)))   # pad cells: masks are 0
        aux = jnp.pad(aux, ((0, 0), (0, N_pad - N)))
    pred5 = pred5.reshape(5, R_pad, LANES)
    aux = aux.reshape(10, R_pad, LANES)

    kernel = functools.partial(_yolo_loss_kernel,
                               inv_2stride=float(1.0 / (2.0 * stride)),
                               tile_r=tile_r)
    # NOTE(v5e): if a profile shows exposed DMA at step boundaries, add
    # pipeline_mode=pl.Buffered(3) to the input BlockSpecs below.
    out = pl.pallas_call(
        kernel,
        out_shape=jax.ShapeDtypeStruct((n_cores, OUT_ROWS, LANES), jnp.float32),
        grid_spec=pltpu.PrefetchScalarGridSpec(
            num_scalar_prefetch=0,
            grid=(n_cores, tiles_per_core),          # (megacore split, reduction)
            in_specs=[
                pl.BlockSpec((5, tile_r, LANES),
                             lambda c, i: (0, c * tiles_per_core + i, 0)),
                pl.BlockSpec((10, tile_r, LANES),
                             lambda c, i: (0, c * tiles_per_core + i, 0)),
            ],
            out_specs=pl.BlockSpec((None, OUT_ROWS, LANES), lambda c, i: (c, 0, 0)),
        ),
        compiler_params=pltpu.CompilerParams(
            dimension_semantics=("parallel", "arbitrary"),
            vmem_limit_bytes=32 * 1024 * 1024),      # 2-buffered slabs ~4 MiB, safe on v7x
    )(pred5, aux)

    # final 8x128 (sublane+lane) reduction outside the kernel, in plain JAX
    s = out.sum(axis=0).reshape(NUM_SUMS, 8 * LANES).sum(axis=1)

    n_obj, n_noobj = s[0], s[1]
    # NOTE: n_obj == 0 would produce nan, matching nn.MSELoss/BCELoss on empty
    # selections in the reference module.
    loss_x = s[2] / n_obj
    loss_y = s[3] / n_obj
    loss_w = s[4] / n_obj
    loss_h = s[5] / n_obj
    loss_conf_obj = s[6] / n_obj
    loss_conf_noobj = s[7] / n_noobj
    loss_conf = loss_conf_obj + 100.0 * loss_conf_noobj
    loss_cls = loss_cls_sum / (n_obj * C)
    total_loss = (loss_x * lambda_xy + loss_y * lambda_xy
                  + loss_w * lambda_wh + loss_h * lambda_wh
                  + loss_conf * lambda_conf + loss_cls * lambda_cls)

    metrics = jnp.stack([
        total_loss, loss_x, loss_y, loss_w, loss_h, loss_conf, loss_cls,
        100.0 * s[8] / n_obj,            # cls_acc
        s[9] / n_obj,                    # conf_obj
        s[10] / n_noobj,                 # conf_noobj
        s[12] / (s[11] + 1e-16),         # precision
        s[12] / (n_obj + 1e-16),         # recall50
        s[13] / (n_obj + 1e-16),         # recall75
    ])
    return total_loss, metrics


# ----------------------------------------------------------------------------
# Module wrapper
# ----------------------------------------------------------------------------
class YOLOLossPallas:
    """Replicates YOLOLoss.forward(pred, targets) semantics.

    Parameters that the PyTorch module parses from the .cfg file (anchors,
    num_classes, img width, ignore_thresh) are supplied directly in-script.
    """

    def __init__(self, anchors, num_classes, img_dim, ignore_thres=0.5):
        self.anchors = jnp.asarray(anchors, jnp.float32)   # (A, 2), raw pixel anchors
        self.num_anchors = int(self.anchors.shape[0])
        self.num_classes = int(num_classes)
        self.img_dim = float(img_dim)
        self.ignore_thres = float(ignore_thres)
        self.lambda_xy = 10.0
        self.lambda_wh = 10.0
        self.lambda_conf = 1.0
        self.lambda_cls = 10.0
        self.metrics = {}
        # jit the WHOLE forward so the channel-major repack fuses under one jit
        # and nothing dispatches as many tiny XLA launches per step.
        self._fwd = jax.jit(functools.partial(
            _yolo_forward,
            num_classes=self.num_classes, img_dim=self.img_dim,
            ignore_thres=self.ignore_thres,
            lambda_xy=self.lambda_xy, lambda_wh=self.lambda_wh,
            lambda_conf=self.lambda_conf, lambda_cls=self.lambda_cls))

    def __call__(self, pred, targets=None):
        if targets is None:
            return pred
        total_loss, m = self._fwd(pred, targets, self.anchors)
        G = int(math.sqrt(pred.shape[2] / self.num_anchors))
        # metrics stay as device scalars: no per-metric float() host syncs
        self.metrics = {
            'loss': m[0], 'x': m[1], 'y': m[2], 'w': m[3], 'h': m[4],
            'conf': m[5], 'cls': m[6], 'cls_acc': m[7],
            'conf_obj': m[8], 'conf_noobj': m[9],
            'precision': m[10], 'recall50': m[11], 'recall75': m[12],
            'grid_size': G,
        }
        return pred, total_loss


# ----------------------------------------------------------------------------
# Demo
# ----------------------------------------------------------------------------
if __name__ == "__main__":
    key = jax.random.PRNGKey(0)
    B, A, G, C = 2, 3, 16, 4
    img_dim = 64
    anchors = [(10.0, 13.0), (16.0, 30.0), (33.0, 23.0)]   # yolo=0 mask [0,1,2]
    Cp = C + 5

    k1, k2, k3, k4 = jax.random.split(key, 4)
    # pred in (0.01, 0.99): conf/cls valid for BCELoss, w/h positive for sqrt
    pred = jax.random.uniform(k1, (B, Cp, A * G * G), jnp.float32, 0.01, 0.99)

    # targets rows: [batch_idx, class_label, cx, cy, w, h] (normalized 0..1)
    nT = 6
    tb = jax.random.randint(k2, (nT,), 0, B).astype(jnp.float32)
    tl = jax.random.randint(k3, (nT,), 0, C).astype(jnp.float32)
    tbox = jax.random.uniform(k4, (nT, 4), jnp.float32, 0.1, 0.9)
    tbox = tbox.at[:, 2:].multiply(0.3)
    targets = jnp.concatenate([tb[:, None], tl[:, None], tbox], axis=1)

    loss_mod = YOLOLossPallas(anchors, num_classes=C, img_dim=img_dim, ignore_thres=0.5)
    out_pred, total_loss = loss_mod(pred, targets)
    jax.block_until_ready(total_loss)
    assert bool(jnp.isfinite(total_loss)), "non-finite loss"
    print("KERNEL_OK")
</pallas_src>

<mosaic_0001>
module attributes {stable_mosaic.version = 11 : i64} {
  func.func @_yolo_loss_kernel(%arg0: i32, %arg1: i32, %arg2: memref<5x16x128xf32, #tpu.memory_space<vmem>>, %arg3: memref<10x16x128xf32, #tpu.memory_space<vmem>>, %arg4: memref<1x112x128xf32, #tpu.memory_space<vmem>>) attributes {dimension_semantics = [#tpu.dimension_semantics<parallel>, #tpu.dimension_semantics<arbitrary>], iteration_bounds = array<i64: 1, 1>, scalar_prefetch = 0 : i64, scratch_operands = 0 : i64, tpu.core_type = #tpu.core_type<tc>, window_params = [{transform_indices = @transform_0, window_bounds = array<i64: 5, 16, 128>}, {transform_indices = @transform_1, window_bounds = array<i64: 10, 16, 128>}, {transform_indices = @transform_2, window_bounds = array<i64: 1, 112, 128>}]} {
    %c0_i32 = arith.constant 0 : i32
    %0 = arith.cmpi eq, %arg1, %c0_i32 : i32
    %1 = arith.extui %0 : i1 to i32
    %c0_i32_0 = arith.constant 0 : i32
    %2 = arith.cmpi ne, %1, %c0_i32_0 : i32
    scf.if %2 {
      %cst_193 = arith.constant 0.000000e+00 : f32
      %308 = vector.broadcast %cst_193 : f32 to vector<112x128xf32>
      %c0_194 = arith.constant 0 : index
      %c0_195 = arith.constant 0 : index
      %c0_196 = arith.constant 0 : index
      %309 = vector.load %arg4[%c0_194, %c0_195, %c0_196] : memref<1x112x128xf32, #tpu.memory_space<vmem>>, vector<1x112x128xf32>
      %310 = vector.shape_cast %309 : vector<1x112x128xf32> to vector<112x128xf32>
      %311 = vector.shape_cast %308 : vector<112x128xf32> to vector<1x112x128xf32>
      tpu.vector_store %arg4[%c0_194, %c0_195, %c0_196], %311 {strides = array<i32>} : memref<1x112x128xf32, #tpu.memory_space<vmem>>, vector<1x112x128xf32>,
    } else {
    }
    %cst = arith.constant 0.000000e+00 : f32
    %3 = vector.broadcast %cst : f32 to vector<8x128xf32>
    %c6 = arith.constant 6 : index
    %c0 = arith.constant 0 : index
    %c0_1 = arith.constant 0 : index
    %4 = vector.load %arg3[%c6, %c0, %c0_1] : memref<10x16x128xf32, #tpu.memory_space<vmem>>, vector<1x8x128xf32>
    %5 = vector.shape_cast %4 : vector<1x8x128xf32> to vector<8x128xf32>
    %c7 = arith.constant 7 : index
    %c0_2 = arith.constant 0 : index
    %c0_3 = arith.constant 0 : index
    %6 = vector.load %arg3[%c7, %c0_2, %c0_3] : memref<10x16x128xf32, #tpu.memory_space<vmem>>, vector<1x8x128xf32>
    %7 = vector.shape_cast %6 : vector<1x8x128xf32> to vector<8x128xf32>
    %8 = arith.addf %3, %5 : vector<8x128xf32>
    %9 = arith.addf %3, %7 : vector<8x128xf32>
    %c0_4 = arith.constant 0 : index
    %c0_5 = arith.constant 0 : index
    %c0_6 = arith.constant 0 : index
    %10 = vector.load %arg2[%c0_4, %c0_5, %c0_6] : memref<5x16x128xf32, #tpu.memory_space<vmem>>, vector<1x8x128xf32>
    %11 = vector.shape_cast %10 : vector<1x8x128xf32> to vector<8x128xf32>
    %cst_7 = arith.constant 1.250000e-01 : f32
    %12 = vector.broadcast %cst_7 : f32 to vector<8x128xf32>
    %13 = arith.mulf %11, %12 : vector<8x128xf32>
    %c0_8 = arith.constant 0 : index
    %c0_9 = arith.constant 0 : index
    %c0_10 = arith.constant 0 : index
    %14 = vector.load %arg3[%c0_8, %c0_9, %c0_10] : memref<10x16x128xf32, #tpu.memory_space<vmem>>, vector<1x8x128xf32>
    %15 = vector.shape_cast %14 : vector<1x8x128xf32> to vector<8x128xf32>
    %16 = arith.addf %13, %15 : vector<8x128xf32>
    %17 = arith.mulf %5, %16 : vector<8x128xf32>
    %18 = arith.mulf %17, %16 : vector<8x128xf32>
    %19 = arith.addf %3, %18 : vector<8x128xf32>
    %c1 = arith.constant 1 : index
    %c0_11 = arith.constant 0 : index
    %c0_12 = arith.constant 0 : index
    %20 = vector.load %arg2[%c1, %c0_11, %c0_12] : memref<5x16x128xf32, #tpu.memory_space<vmem>>, vector<1x8x128xf32>
    %21 = vector.shape_cast %20 : vector<1x8x128xf32> to vector<8x128xf32>
    %cst_13 = arith.constant 1.250000e-01 : f32
    %22 = vector.broadcast %cst_13 : f32 to vector<8x128xf32>
    %23 = arith.mulf %21, %22 : vector<8x128xf32>
    %c1_14 = arith.constant 1 : index
    %c0_15 = arith.constant 0 : index
    %c0_16 = arith.constant 0 : index
    %24 = vector.load %arg3[%c1_14, %c0_15, %c0_16] : memref<10x16x128xf32, #tpu.memory_space<vmem>>, vector<1x8x128xf32>
    %25 = vector.shape_cast %24 : vector<1x8x128xf32> to vector<8x128xf32>
    %26 = arith.addf %23, %25 : vector<8x128xf32>
    %27 = arith.mulf %5, %26 : vector<8x128xf32>
    %28 = arith.mulf %27, %26 : vector<8x128xf32>
    %29 = arith.addf %3, %28 : vector<8x128xf32>
    %cst_17 = arith.constant 0.000000e+00 : f32
    %30 = vector.broadcast %cst_17 : f32 to vector<8x128xf32>
    %31 = arith.cmpf ogt, %5, %30 : vector<8x128xf32>
    %c2 = arith.constant 2 : index
    %c0_18 = arith.constant 0 : index
    %c0_19 = arith.constant 0 : index
    %32 = vector.load %arg2[%c2, %c0_18, %c0_19] : memref<5x16x128xf32, #tpu.memory_space<vmem>>, vector<1x8x128xf32>
    %33 = vector.shape_cast %32 : vector<1x8x128xf32> to vector<8x128xf32>
    %cst_20 = arith.constant 1.000000e+00 : f32
    %34 = vector.broadcast %cst_20 : f32 to vector<8x128xf32>
    %35 = arith.select %31, %33, %34 : vector<8x128xi1>, vector<8x128xf32>
    %36 = math.sqrt %35 : vector<8x128xf32>
    %c2_21 = arith.constant 2 : index
    %c0_22 = arith.constant 0 : index
    %c0_23 = arith.constant 0 : index
    %37 = vector.load %arg3[%c2_21, %c0_22, %c0_23] : memref<10x16x128xf32, #tpu.memory_space<vmem>>, vector<1x8x128xf32>
    %38 = vector.shape_cast %37 : vector<1x8x128xf32> to vector<8x128xf32>
    %39 = arith.mulf %36, %38 : vector<8x128xf32>
    %c3 = arith.constant 3 : index
    %c0_24 = arith.constant 0 : index
    %c0_25 = arith.constant 0 : index
    %40 = vector.load %arg3[%c3, %c0_24, %c0_25] : memref<10x16x128xf32, #tpu.memory_space<vmem>>, vector<1x8x128xf32>
    %41 = vector.shape_cast %40 : vector<1x8x128xf32> to vector<8x128xf32>
    %42 = arith.subf %39, %41 : vector<8x128xf32>
    %43 = arith.mulf %5, %42 : vector<8x128xf32>
    %44 = arith.mulf %43, %42 : vector<8x128xf32>
    %45 = arith.addf %3, %44 : vector<8x128xf32>
    %cst_26 = arith.constant 0.000000e+00 : f32
    %46 = vector.broadcast %cst_26 : f32 to vector<8x128xf32>
    %47 = arith.cmpf ogt, %5, %46 : vector<8x128xf32>
    %c3_27 = arith.constant 3 : index
    %c0_28 = arith.constant 0 : index
    %c0_29 = arith.constant 0 : index
    %48 = vector.load %arg2[%c3_27, %c0_28, %c0_29] : memref<5x16x128xf32, #tpu.memory_space<vmem>>, vector<1x8x128xf32>
    %49 = vector.shape_cast %48 : vector<1x8x128xf32> to vector<8x128xf32>
    %cst_30 = arith.constant 1.000000e+00 : f32
    %50 = vector.broadcast %cst_30 : f32 to vector<8x128xf32>
    %51 = arith.select %47, %49, %50 : vector<8x128xi1>, vector<8x128xf32>
    %52 = math.sqrt %51 : vector<8x128xf32>
    %c4 = arith.constant 4 : index
    %c0_31 = arith.constant 0 : index
    %c0_32 = arith.constant 0 : index
    %53 = vector.load %arg3[%c4, %c0_31, %c0_32] : memref<10x16x128xf32, #tpu.memory_space<vmem>>, vector<1x8x128xf32>
    %54 = vector.shape_cast %53 : vector<1x8x128xf32> to vector<8x128xf32>
    %55 = arith.mulf %52, %54 : vector<8x128xf32>
    %c5 = arith.constant 5 : index
    %c0_33 = arith.constant 0 : index
    %c0_34 = arith.constant 0 : index
    %56 = vector.load %arg3[%c5, %c0_33, %c0_34] : memref<10x16x128xf32, #tpu.memory_space<vmem>>, vector<1x8x128xf32>
    %57 = vector.shape_cast %56 : vector<1x8x128xf32> to vector<8x128xf32>
    %58 = arith.subf %55, %57 : vector<8x128xf32>
    %59 = arith.mulf %5, %58 : vector<8x128xf32>
    %60 = arith.mulf %59, %58 : vector<8x128xf32>
    %61 = arith.addf %3, %60 : vector<8x128xf32>
    %c4_35 = arith.constant 4 : index
    %c0_36 = arith.constant 0 : index
    %c0_37 = arith.constant 0 : index
    %62 = vector.load %arg2[%c4_35, %c0_36, %c0_37] : memref<5x16x128xf32, #tpu.memory_space<vmem>>, vector<1x8x128xf32>
    %63 = vector.shape_cast %62 : vector<1x8x128xf32> to vector<8x128xf32>
    %cst_38 = arith.constant 0.000000e+00 : f32
    %64 = vector.broadcast %cst_38 : f32 to vector<8x128xf32>
    %65 = arith.cmpf ogt, %5, %64 : vector<8x128xf32>
    %cst_39 = arith.constant 5.000000e-01 : f32
    %66 = vector.broadcast %cst_39 : f32 to vector<8x128xf32>
    %67 = arith.select %65, %63, %66 : vector<8x128xi1>, vector<8x128xf32>
    %cst_40 = arith.constant 0.000000e+00 : f32
    %68 = vector.broadcast %cst_40 : f32 to vector<8x128xf32>
    %69 = arith.cmpf ogt, %7, %68 : vector<8x128xf32>
    %cst_41 = arith.constant 5.000000e-01 : f32
    %70 = vector.broadcast %cst_41 : f32 to vector<8x128xf32>
    %71 = arith.select %69, %63, %70 : vector<8x128xi1>, vector<8x128xf32>
    %72 = math.log %67 : vector<8x128xf32>
    %cst_42 = arith.constant -1.000000e+02 : f32
    %73 = vector.broadcast %cst_42 : f32 to vector<8x128xf32>
    %74 = arith.maximumf %72, %73 : vector<8x128xf32>
    %cst_43 = arith.constant 0.000000e+00 : f32
    %75 = vector.broadcast %cst_43 : f32 to vector<8x128xf32>
    %76 = arith.subf %75, %74 : vector<8x128xf32>
    %77 = arith.mulf %5, %76 : vector<8x128xf32>
    %78 = arith.addf %3, %77 : vector<8x128xf32>
    %cst_44 = arith.constant 1.000000e+00 : f32
    %79 = vector.broadcast %cst_44 : f32 to vector<8x128xf32>
    %80 = arith.subf %79, %71 : vector<8x128xf32>
    %81 = math.log %80 : vector<8x128xf32>
    %cst_45 = arith.constant -1.000000e+02 : f32
    %82 = vector.broadcast %cst_45 : f32 to vector<8x128xf32>
    %83 = arith.maximumf %81, %82 : vector<8x128xf32>
    %cst_46 = arith.constant 0.000000e+00 : f32
    %84 = vector.broadcast %cst_46 : f32 to vector<8x128xf32>
    %85 = arith.subf %84, %83 : vector<8x128xf32>
    %86 = arith.mulf %7, %85 : vector<8x128xf32>
    %87 = arith.addf %3, %86 : vector<8x128xf32>
    %c8 = arith.constant 8 : index
    %c0_47 = arith.constant 0 : index
    %c0_48 = arith.constant 0 : index
    %88 = vector.load %arg3[%c8, %c0_47, %c0_48] : memref<10x16x128xf32, #tpu.memory_space<vmem>>, vector<1x8x128xf32>
    %89 = vector.shape_cast %88 : vector<1x8x128xf32> to vector<8x128xf32>
    %90 = arith.mulf %5, %89 : vector<8x128xf32>
    %91 = arith.addf %3, %90 : vector<8x128xf32>
    %92 = arith.mulf %5, %63 : vector<8x128xf32>
    %93 = arith.addf %3, %92 : vector<8x128xf32>
    %94 = arith.mulf %7, %63 : vector<8x128xf32>
    %95 = arith.addf %3, %94 : vector<8x128xf32>
    %cst_49 = arith.constant 5.000000e-01 : f32
    %96 = vector.broadcast %cst_49 : f32 to vector<8x128xf32>
    %97 = arith.cmpf ogt, %63, %96 : vector<8x128xf32>
    %98 = arith.extui %97 : vector<8x128xi1> to vector<8x128xi32>
    %99 = arith.sitofp %98 : vector<8x128xi32> to vector<8x128xf32>
    %100 = arith.addf %3, %99 : vector<8x128xf32>
    %101 = arith.mulf %99, %89 : vector<8x128xf32>
    %c9 = arith.constant 9 : index
    %c0_50 = arith.constant 0 : index
    %c0_51 = arith.constant 0 : index
    %102 = vector.load %arg3[%c9, %c0_50, %c0_51] : memref<10x16x128xf32, #tpu.memory_space<vmem>>, vector<1x8x128xf32>
    %103 = vector.shape_cast %102 : vector<1x8x128xf32> to vector<8x128xf32>
    %cst_52 = arith.constant 5.000000e-01 : f32
    %104 = vector.broadcast %cst_52 : f32 to vector<8x128xf32>
    %105 = arith.cmpf ogt, %103, %104 : vector<8x128xf32>
    %cst_53 = arith.constant 0.000000e+00 : f32
    %106 = vector.broadcast %cst_53 : f32 to vector<8x128xf32>
    %107 = arith.select %105, %101, %106 : vector<8x128xi1>, vector<8x128xf32>
    %108 = arith.addf %3, %107 : vector<8x128xf32>
    %cst_54 = arith.constant 7.500000e-01 : f32
    %109 = vector.broadcast %cst_54 : f32 to vector<8x128xf32>
    %110 = arith.cmpf ogt, %103, %109 : vector<8x128xf32>
    %cst_55 = arith.constant 0.000000e+00 : f32
    %111 = vector.broadcast %cst_55 : f32 to vector<8x128xf32>
    %112 = arith.select %110, %101, %111 : vector<8x128xi1>, vector<8x128xf32>
    %113 = arith.addf %3, %112 : vector<8x128xf32>
    %c6_56 = arith.constant 6 : index
    %c8_57 = arith.constant 8 : index
    %c0_58 = arith.constant 0 : index
    %114 = vector.load %arg3[%c6_56, %c8_57, %c0_58] : memref<10x16x128xf32, #tpu.memory_space<vmem>>, vector<1x8x128xf32>
    %115 = vector.shape_cast %114 : vector<1x8x128xf32> to vector<8x128xf32>
    %c7_59 = arith.constant 7 : index
    %c8_60 = arith.constant 8 : index
    %c0_61 = arith.constant 0 : index
    %116 = vector.load %arg3[%c7_59, %c8_60, %c0_61] : memref<10x16x128xf32, #tpu.memory_space<vmem>>, vector<1x8x128xf32>
    %117 = vector.shape_cast %116 : vector<1x8x128xf32> to vector<8x128xf32>
    %118 = arith.addf %8, %115 : vector<8x128xf32>
    %119 = arith.addf %9, %117 : vector<8x128xf32>
    %c0_62 = arith.constant 0 : index
    %c8_63 = arith.constant 8 : index
    %c0_64 = arith.constant 0 : index
    %120 = vector.load %arg2[%c0_62, %c8_63, %c0_64] : memref<5x16x128xf32, #tpu.memory_space<vmem>>, vector<1x8x128xf32>
    %121 = vector.shape_cast %120 : vector<1x8x128xf32> to vector<8x128xf32>
    %cst_65 = arith.constant 1.250000e-01 : f32
    %122 = vector.broadcast %cst_65 : f32 to vector<8x128xf32>
    %123 = arith.mulf %121, %122 : vector<8x128xf32>
    %c0_66 = arith.constant 0 : index
    %c8_67 = arith.constant 8 : index
    %c0_68 = arith.constant 0 : index
    %124 = vector.load %arg3[%c0_66, %c8_67, %c0_68] : memref<10x16x128xf32, #tpu.memory_space<vmem>>, vector<1x8x128xf32>
    %125 = vector.shape_cast %124 : vector<1x8x128xf32> to vector<8x128xf32>
    %126 = arith.addf %123, %125 : vector<8x128xf32>
    %127 = arith.mulf %115, %126 : vector<8x128xf32>
    %128 = arith.mulf %127, %126 : vector<8x128xf32>
    %129 = arith.addf %19, %128 : vector<8x128xf32>
    %c1_69 = arith.constant 1 : index
    %c8_70 = arith.constant 8 : index
    %c0_71 = arith.constant 0 : index
    %130 = vector.load %arg2[%c1_69, %c8_70, %c0_71] : memref<5x16x128xf32, #tpu.memory_space<vmem>>, vector<1x8x128xf32>
    %131 = vector.shape_cast %130 : vector<1x8x128xf32> to vector<8x128xf32>
    %cst_72 = arith.constant 1.250000e-01 : f32
    %132 = vector.broadcast %cst_72 : f32 to vector<8x128xf32>
    %133 = arith.mulf %131, %132 : vector<8x128xf32>
    %c1_73 = arith.constant 1 : index
    %c8_74 = arith.constant 8 : index
    %c0_75 = arith.constant 0 : index
    %134 = vector.load %arg3[%c1_73, %c8_74, %c0_75] : memref<10x16x128xf32, #tpu.memory_space<vmem>>, vector<1x8x128xf32>
    %135 = vector.shape_cast %134 : vector<1x8x128xf32> to vector<8x128xf32>
    %136 = arith.addf %133, %135 : vector<8x128xf32>
    %137 = arith.mulf %115, %136 : vector<8x128xf32>
    %138 = arith.mulf %137, %136 : vector<8x128xf32>
    %139 = arith.addf %29, %138 : vector<8x128xf32>
    %cst_76 = arith.constant 0.000000e+00 : f32
    %140 = vector.broadcast %cst_76 : f32 to vector<8x128xf32>
    %141 = arith.cmpf ogt, %115, %140 : vector<8x128xf32>
    %c2_77 = arith.constant 2 : index
    %c8_78 = arith.constant 8 : index
    %c0_79 = arith.constant 0 : index
    %142 = vector.load %arg2[%c2_77, %c8_78, %c0_79] : memref<5x16x128xf32, #tpu.memory_space<vmem>>, vector<1x8x128xf32>
    %143 = vector.shape_cast %142 : vector<1x8x128xf32> to vector<8x128xf32>
    %cst_80 = arith.constant 1.000000e+00 : f32
    %144 = vector.broadcast %cst_80 : f32 to vector<8x128xf32>
    %145 = arith.select %141, %143, %144 : vector<8x128xi1>, vector<8x128xf32>
    %146 = math.sqrt %145 : vector<8x128xf32>
    %c2_81 = arith.constant 2 : index
    %c8_82 = arith.constant 8 : index
    %c0_83 = arith.constant 0 : index
    %147 = vector.load %arg3[%c2_81, %c8_82, %c0_83] : memref<10x16x128xf32, #tpu.memory_space<vmem>>, vector<1x8x128xf32>
    %148 = vector.shape_cast %147 : vector<1x8x128xf32> to vector<8x128xf32>
    %149 = arith.mulf %146, %148 : vector<8x128xf32>
    %c3_84 = arith.constant 3 : index
    %c8_85 = arith.constant 8 : index
    %c0_86 = arith.constant 0 : index
    %150 = vector.load %arg3[%c3_84, %c8_85, %c0_86] : memref<10x16x128xf32, #tpu.memory_space<vmem>>, vector<1x8x128xf32>
    %151 = vector.shape_cast %150 : vector<1x8x128xf32> to vector<8x128xf32>
    %152 = arith.subf %149, %151 : vector<8x128xf32>
    %153 = arith.mulf %115, %152 : vector<8x128xf32>
    %154 = arith.mulf %153, %152 : vector<8x128xf32>
    %155 = arith.addf %45, %154 : vector<8x128xf32>
    %cst_87 = arith.constant 0.000000e+00 : f32
    %156 = vector.broadcast %cst_87 : f32 to vector<8x128xf32>
    %157 = arith.cmpf ogt, %115, %156 : vector<8x128xf32>
    %c3_88 = arith.constant 3 : index
    %c8_89 = arith.constant 8 : index
    %c0_90 = arith.constant 0 : index
    %158 = vector.load %arg2[%c3_88, %c8_89, %c0_90] : memref<5x16x128xf32, #tpu.memory_space<vmem>>, vector<1x8x128xf32>
    %159 = vector.shape_cast %158 : vector<1x8x128xf32> to vector<8x128xf32>
    %cst_91 = arith.constant 1.000000e+00 : f32
    %160 = vector.broadcast %cst_91 : f32 to vector<8x128xf32>
    %161 = arith.select %157, %159, %160 : vector<8x128xi1>, vector<8x128xf32>
    %162 = math.sqrt %161 : vector<8x128xf32>
    %c4_92 = arith.constant 4 : index
    %c8_93 = arith.constant 8 : index
    %c0_94 = arith.constant 0 : index
    %163 = vector.load %arg3[%c4_92, %c8_93, %c0_94] : memref<10x16x128xf32, #tpu.memory_space<vmem>>, vector<1x8x128xf32>
    %164 = vector.shape_cast %163 : vector<1x8x128xf32> to vector<8x128xf32>
    %165 = arith.mulf %162, %164 : vector<8x128xf32>
    %c5_95 = arith.constant 5 : index
    %c8_96 = arith.constant 8 : index
    %c0_97 = arith.constant 0 : index
    %166 = vector.load %arg3[%c5_95, %c8_96, %c0_97] : memref<10x16x128xf32, #tpu.memory_space<vmem>>, vector<1x8x128xf32>
    %167 = vector.shape_cast %166 : vector<1x8x128xf32> to vector<8x128xf32>
    %168 = arith.subf %165, %167 : vector<8x128xf32>
    %169 = arith.mulf %115, %168 : vector<8x128xf32>
    %170 = arith.mulf %169, %168 : vector<8x128xf32>
    %171 = arith.addf %61, %170 : vector<8x128xf32>
    %c4_98 = arith.constant 4 : index
    %c8_99 = arith.constant 8 : index
    %c0_100 = arith.constant 0 : index
    %172 = vector.load %arg2[%c4_98, %c8_99, %c0_100] : memref<5x16x128xf32, #tpu.memory_space<vmem>>, vector<1x8x128xf32>
    %173 = vector.shape_cast %172 : vector<1x8x128xf32> to vector<8x128xf32>
    %cst_101 = arith.constant 0.000000e+00 : f32
    %174 = vector.broadcast %cst_101 : f32 to vector<8x128xf32>
    %175 = arith.cmpf ogt, %115, %174 : vector<8x128xf32>
    %cst_102 = arith.constant 5.000000e-01 : f32
    %176 = vector.broadcast %cst_102 : f32 to vector<8x128xf32>
    %177 = arith.select %175, %173, %176 : vector<8x128xi1>, vector<8x128xf32>
    %cst_103 = arith.constant 0.000000e+00 : f32
    %178 = vector.broadcast %cst_103 : f32 to vector<8x128xf32>
    %179 = arith.cmpf ogt, %117, %178 : vector<8x128xf32>
    %cst_104 = arith.constant 5.000000e-01 : f32
    %180 = vector.broadcast %cst_104 : f32 to vector<8x128xf32>
    %181 = arith.select %179, %173, %180 : vector<8x128xi1>, vector<8x128xf32>
    %182 = math.log %177 : vector<8x128xf32>
    %cst_105 = arith.constant -1.000000e+02 : f32
    %183 = vector.broadcast %cst_105 : f32 to vector<8x128xf32>
    %184 = arith.maximumf %182, %183 : vector<8x128xf32>
    %cst_106 = arith.constant 0.000000e+00 : f32
    %185 = vector.broadcast %cst_106 : f32 to vector<8x128xf32>
    %186 = arith.subf %185, %184 : vector<8x128xf32>
    %187 = arith.mulf %115, %186 : vector<8x128xf32>
    %188 = arith.addf %78, %187 : vector<8x128xf32>
    %cst_107 = arith.constant 1.000000e+00 : f32
    %189 = vector.broadcast %cst_107 : f32 to vector<8x128xf32>
    %190 = arith.subf %189, %181 : vector<8x128xf32>
    %191 = math.log %190 : vector<8x128xf32>
    %cst_108 = arith.constant -1.000000e+02 : f32
    %192 = vector.broadcast %cst_108 : f32 to vector<8x128xf32>
    %193 = arith.maximumf %191, %192 : vector<8x128xf32>
    %cst_109 = arith.constant 0.000000e+00 : f32
    %194 = vector.broadcast %cst_109 : f32 to vector<8x128xf32>
    %195 = arith.subf %194, %193 : vector<8x128xf32>
    %196 = arith.mulf %117, %195 : vector<8x128xf32>
    %197 = arith.addf %87, %196 : vector<8x128xf32>
    %c8_110 = arith.constant 8 : index
    %c8_111 = arith.constant 8 : index
    %c0_112 = arith.constant 0 : index
    %198 = vector.load %arg3[%c8_110, %c8_111, %c0_112] : memref<10x16x128xf32, #tpu.memory_space<vmem>>, vector<1x8x128xf32>
    %199 = vector.shape_cast %198 : vector<1x8x128xf32> to vector<8x128xf32>
    %200 = arith.mulf %115, %199 : vector<8x128xf32>
    %201 = arith.addf %91, %200 : vector<8x128xf32>
    %202 = arith.mulf %115, %173 : vector<8x128xf32>
    %203 = arith.addf %93, %202 : vector<8x128xf32>
    %204 = arith.mulf %117, %173 : vector<8x128xf32>
    %205 = arith.addf %95, %204 : vector<8x128xf32>
    %cst_113 = arith.constant 5.000000e-01 : f32
    %206 = vector.broadcast %cst_113 : f32 to vector<8x128xf32>
    %207 = arith.cmpf ogt, %173, %206 : vector<8x128xf32>
    %208 = arith.extui %207 : vector<8x128xi1> to vector<8x128xi32>
    %209 = arith.sitofp %208 : vector<8x128xi32> to vector<8x128xf32>
    %210 = arith.addf %100, %209 : vector<8x128xf32>
    %211 = arith.mulf %209, %199 : vector<8x128xf32>
    %c9_114 = arith.constant 9 : index
    %c8_115 = arith.constant 8 : index
    %c0_116 = arith.constant 0 : index
    %212 = vector.load %arg3[%c9_114, %c8_115, %c0_116] : memref<10x16x128xf32, #tpu.memory_space<vmem>>, vector<1x8x128xf32>
    %213 = vector.shape_cast %212 : vector<1x8x128xf32> to vector<8x128xf32>
    %cst_117 = arith.constant 5.000000e-01 : f32
    %214 = vector.broadcast %cst_117 : f32 to vector<8x128xf32>
    %215 = arith.cmpf ogt, %213, %214 : vector<8x128xf32>
    %cst_118 = arith.constant 0.000000e+00 : f32
    %216 = vector.broadcast %cst_118 : f32 to vector<8x128xf32>
    %217 = arith.select %215, %211, %216 : vector<8x128xi1>, vector<8x128xf32>
    %218 = arith.addf %108, %217 : vector<8x128xf32>
    %cst_119 = arith.constant 7.500000e-01 : f32
    %219 = vector.broadcast %cst_119 : f32 to vector<8x128xf32>
    %220 = arith.cmpf ogt, %213, %219 : vector<8x128xf32>
    %cst_120 = arith.constant 0.000000e+00 : f32
    %221 = vector.broadcast %cst_120 : f32 to vector<8x128xf32>
    %222 = arith.select %220, %211, %221 : vector<8x128xi1>, vector<8x128xf32>
    %223 = arith.addf %113, %222 : vector<8x128xf32>
    %c0_121 = arith.constant 0 : index
    %c0_122 = arith.constant 0 : index
    %c0_123 = arith.constant 0 : index
    %224 = vector.load %arg4[%c0_121, %c0_122, %c0_123] : memref<1x112x128xf32, #tpu.memory_space<vmem>>, vector<1x8x128xf32>
    %225 = vector.shape_cast %224 : vector<1x8x128xf32> to vector<8x128xf32>
    %226 = arith.addf %225, %118 : vector<8x128xf32>
    %c0_124 = arith.constant 0 : index
    %c0_125 = arith.constant 0 : index
    %c0_126 = arith.constant 0 : index
    %227 = vector.load %arg4[%c0_124, %c0_125, %c0_126] : memref<1x112x128xf32, #tpu.memory_space<vmem>>, vector<1x8x128xf32>
    %228 = vector.shape_cast %227 : vector<1x8x128xf32> to vector<8x128xf32>
    %229 = vector.shape_cast %226 : vector<8x128xf32> to vector<1x8x128xf32>
    tpu.vector_store %arg4[%c0_124, %c0_125, %c0_126], %229 {strides = array<i32>} : memref<1x112x128xf32, #tpu.memory_space<vmem>>, vector<1x8x128xf32>,
    %c0_127 = arith.constant 0 : index
    %c8_128 = arith.constant 8 : index
    %c0_129 = arith.constant 0 : index
    %230 = vector.load %arg4[%c0_127, %c8_128, %c0_129] : memref<1x112x128xf32, #tpu.memory_space<vmem>>, vector<1x8x128xf32>
    %231 = vector.shape_cast %230 : vector<1x8x128xf32> to vector<8x128xf32>
    %232 = arith.addf %231, %119 : vector<8x128xf32>
    %c0_130 = arith.constant 0 : index
    %c8_131 = arith.constant 8 : index
    %c0_132 = arith.constant 0 : index
    %233 = vector.load %arg4[%c0_130, %c8_131, %c0_132] : memref<1x112x128xf32, #tpu.memory_space<vmem>>, vector<1x8x128xf32>
    %234 = vector.shape_cast %233 : vector<1x8x128xf32> to vector<8x128xf32>
    %235 = vector.shape_cast %232 : vector<8x128xf32> to vector<1x8x128xf32>
    tpu.vector_store %arg4[%c0_130, %c8_131, %c0_132], %235 {strides = array<i32>} : memref<1x112x128xf32, #tpu.memory_space<vmem>>, vector<1x8x128xf32>,
    %c0_133 = arith.constant 0 : index
    %c16 = arith.constant 16 : index
    %c0_134 = arith.constant 0 : index
    %236 = vector.load %arg4[%c0_133, %c16, %c0_134] : memref<1x112x128xf32, #tpu.memory_space<vmem>>, vector<1x8x128xf32>
    %237 = vector.shape_cast %236 : vector<1x8x128xf32> to vector<8x128xf32>
    %238 = arith.addf %237, %129 : vector<8x128xf32>
    %c0_135 = arith.constant 0 : index
    %c16_136 = arith.constant 16 : index
    %c0_137 = arith.constant 0 : index
    %239 = vector.load %arg4[%c0_135, %c16_136, %c0_137] : memref<1x112x128xf32, #tpu.memory_space<vmem>>, vector<1x8x128xf32>
    %240 = vector.shape_cast %239 : vector<1x8x128xf32> to vector<8x128xf32>
    %241 = vector.shape_cast %238 : vector<8x128xf32> to vector<1x8x128xf32>
    tpu.vector_store %arg4[%c0_135, %c16_136, %c0_137], %241 {strides = array<i32>} : memref<1x112x128xf32, #tpu.memory_space<vmem>>, vector<1x8x128xf32>,
    %c0_138 = arith.constant 0 : index
    %c24 = arith.constant 24 : index
    %c0_139 = arith.constant 0 : index
    %242 = vector.load %arg4[%c0_138, %c24, %c0_139] : memref<1x112x128xf32, #tpu.memory_space<vmem>>, vector<1x8x128xf32>
    %243 = vector.shape_cast %242 : vector<1x8x128xf32> to vector<8x128xf32>
    %244 = arith.addf %243, %139 : vector<8x128xf32>
    %c0_140 = arith.constant 0 : index
    %c24_141 = arith.constant 24 : index
    %c0_142 = arith.constant 0 : index
    %245 = vector.load %arg4[%c0_140, %c24_141, %c0_142] : memref<1x112x128xf32, #tpu.memory_space<vmem>>, vector<1x8x128xf32>
    %246 = vector.shape_cast %245 : vector<1x8x128xf32> to vector<8x128xf32>
    %247 = vector.shape_cast %244 : vector<8x128xf32> to vector<1x8x128xf32>
    tpu.vector_store %arg4[%c0_140, %c24_141, %c0_142], %247 {strides = array<i32>} : memref<1x112x128xf32, #tpu.memory_space<vmem>>, vector<1x8x128xf32>,
    %c0_143 = arith.constant 0 : index
    %c32 = arith.constant 32 : index
    %c0_144 = arith.constant 0 : index
    %248 = vector.load %arg4[%c0_143, %c32, %c0_144] : memref<1x112x128xf32, #tpu.memory_space<vmem>>, vector<1x8x128xf32>
    %249 = vector.shape_cast %248 : vector<1x8x128xf32> to vector<8x128xf32>
    %250 = arith.addf %249, %155 : vector<8x128xf32>
    %c0_145 = arith.constant 0 : index
    %c32_146 = arith.constant 32 : index
    %c0_147 = arith.constant 0 : index
    %251 = vector.load %arg4[%c0_145, %c32_146, %c0_147] : memref<1x112x128xf32, #tpu.memory_space<vmem>>, vector<1x8x128xf32>
    %252 = vector.shape_cast %251 : vector<1x8x128xf32> to vector<8x128xf32>
    %253 = vector.shape_cast %250 : vector<8x128xf32> to vector<1x8x128xf32>
    tpu.vector_store %arg4[%c0_145, %c32_146, %c0_147], %253 {strides = array<i32>} : memref<1x112x128xf32, #tpu.memory_space<vmem>>, vector<1x8x128xf32>,
    %c0_148 = arith.constant 0 : index
    %c40 = arith.constant 40 : index
    %c0_149 = arith.constant 0 : index
    %254 = vector.load %arg4[%c0_148, %c40, %c0_149] : memref<1x112x128xf32, #tpu.memory_space<vmem>>, vector<1x8x128xf32>
    %255 = vector.shape_cast %254 : vector<1x8x128xf32> to vector<8x128xf32>
    %256 = arith.addf %255, %171 : vector<8x128xf32>
    %c0_150 = arith.constant 0 : index
    %c40_151 = arith.constant 40 : index
    %c0_152 = arith.constant 0 : index
    %257 = vector.load %arg4[%c0_150, %c40_151, %c0_152] : memref<1x112x128xf32, #tpu.memory_space<vmem>>, vector<1x8x128xf32>
    %258 = vector.shape_cast %257 : vector<1x8x128xf32> to vector<8x128xf32>
    %259 = vector.shape_cast %256 : vector<8x128xf32> to vector<1x8x128xf32>
    tpu.vector_store %arg4[%c0_150, %c40_151, %c0_152], %259 {strides = array<i32>} : memref<1x112x128xf32, #tpu.memory_space<vmem>>, vector<1x8x128xf32>,
    %c0_153 = arith.constant 0 : index
    %c48 = arith.constant 48 : index
    %c0_154 = arith.constant 0 : index
    %260 = vector.load %arg4[%c0_153, %c48, %c0_154] : memref<1x112x128xf32, #tpu.memory_space<vmem>>, vector<1x8x128xf32>
    %261 = vector.shape_cast %260 : vector<1x8x128xf32> to vector<8x128xf32>
    %262 = arith.addf %261, %188 : vector<8x128xf32>
    %c0_155 = arith.constant 0 : index
    %c48_156 = arith.constant 48 : index
    %c0_157 = arith.constant 0 : index
    %263 = vector.load %arg4[%c0_155, %c48_156, %c0_157] : memref<1x112x128xf32, #tpu.memory_space<vmem>>, vector<1x8x128xf32>
    %264 = vector.shape_cast %263 : vector<1x8x128xf32> to vector<8x128xf32>
    %265 = vector.shape_cast %262 : vector<8x128xf32> to vector<1x8x128xf32>
    tpu.vector_store %arg4[%c0_155, %c48_156, %c0_157], %265 {strides = array<i32>} : memref<1x112x128xf32, #tpu.memory_space<vmem>>, vector<1x8x128xf32>,
    %c0_158 = arith.constant 0 : index
    %c56 = arith.constant 56 : index
    %c0_159 = arith.constant 0 : index
    %266 = vector.load %arg4[%c0_158, %c56, %c0_159] : memref<1x112x128xf32, #tpu.memory_space<vmem>>, vector<1x8x128xf32>
    %267 = vector.shape_cast %266 : vector<1x8x128xf32> to vector<8x128xf32>
    %268 = arith.addf %267, %197 : vector<8x128xf32>
    %c0_160 = arith.constant 0 : index
    %c56_161 = arith.constant 56 : index
    %c0_162 = arith.constant 0 : index
    %269 = vector.load %arg4[%c0_160, %c56_161, %c0_162] : memref<1x112x128xf32, #tpu.memory_space<vmem>>, vector<1x8x128xf32>
    %270 = vector.shape_cast %269 : vector<1x8x128xf32> to vector<8x128xf32>
    %271 = vector.shape_cast %268 : vector<8x128xf32> to vector<1x8x128xf32>
    tpu.vector_store %arg4[%c0_160, %c56_161, %c0_162], %271 {strides = array<i32>} : memref<1x112x128xf32, #tpu.memory_space<vmem>>, vector<1x8x128xf32>,
    %c0_163 = arith.constant 0 : index
    %c64 = arith.constant 64 : index
    %c0_164 = arith.constant 0 : index
    %272 = vector.load %arg4[%c0_163, %c64, %c0_164] : memref<1x112x128xf32, #tpu.memory_space<vmem>>, vector<1x8x128xf32>
    %273 = vector.shape_cast %272 : vector<1x8x128xf32> to vector<8x128xf32>
    %274 = arith.addf %273, %201 : vector<8x128xf32>
    %c0_165 = arith.constant 0 : index
    %c64_166 = arith.constant 64 : index
    %c0_167 = arith.constant 0 : index
    %275 = vector.load %arg4[%c0_165, %c64_166, %c0_167] : memref<1x112x128xf32, #tpu.memory_space<vmem>>, vector<1x8x128xf32>
    %276 = vector.shape_cast %275 : vector<1x8x128xf32> to vector<8x128xf32>
    %277 = vector.shape_cast %274 : vector<8x128xf32> to vector<1x8x128xf32>
    tpu.vector_store %arg4[%c0_165, %c64_166, %c0_167], %277 {strides = array<i32>} : memref<1x112x128xf32, #tpu.memory_space<vmem>>, vector<1x8x128xf32>,
    %c0_168 = arith.constant 0 : index
    %c72 = arith.constant 72 : index
    %c0_169 = arith.constant 0 : index
    %278 = vector.load %arg4[%c0_168, %c72, %c0_169] : memref<1x112x128xf32, #tpu.memory_space<vmem>>, vector<1x8x128xf32>
    %279 = vector.shape_cast %278 : vector<1x8x128xf32> to vector<8x128xf32>
    %280 = arith.addf %279, %203 : vector<8x128xf32>
    %c0_170 = arith.constant 0 : index
    %c72_171 = arith.constant 72 : index
    %c0_172 = arith.constant 0 : index
    %281 = vector.load %arg4[%c0_170, %c72_171, %c0_172] : memref<1x112x128xf32, #tpu.memory_space<vmem>>, vector<1x8x128xf32>
    %282 = vector.shape_cast %281 : vector<1x8x128xf32> to vector<8x128xf32>
    %283 = vector.shape_cast %280 : vector<8x128xf32> to vector<1x8x128xf32>
    tpu.vector_store %arg4[%c0_170, %c72_171, %c0_172], %283 {strides = array<i32>} : memref<1x112x128xf32, #tpu.memory_space<vmem>>, vector<1x8x128xf32>,
    %c0_173 = arith.constant 0 : index
    %c80 = arith.constant 80 : index
    %c0_174 = arith.constant 0 : index
    %284 = vector.load %arg4[%c0_173, %c80, %c0_174] : memref<1x112x128xf32, #tpu.memory_space<vmem>>, vector<1x8x128xf32>
    %285 = vector.shape_cast %284 : vector<1x8x128xf32> to vector<8x128xf32>
    %286 = arith.addf %285, %205 : vector<8x128xf32>
    %c0_175 = arith.constant 0 : index
    %c80_176 = arith.constant 80 : index
    %c0_177 = arith.constant 0 : index
    %287 = vector.load %arg4[%c0_175, %c80_176, %c0_177] : memref<1x112x128xf32, #tpu.memory_space<vmem>>, vector<1x8x128xf32>
    %288 = vector.shape_cast %287 : vector<1x8x128xf32> to vector<8x128xf32>
    %289 = vector.shape_cast %286 : vector<8x128xf32> to vector<1x8x128xf32>
    tpu.vector_store %arg4[%c0_175, %c80_176, %c0_177], %289 {strides = array<i32>} : memref<1x112x128xf32, #tpu.memory_space<vmem>>, vector<1x8x128xf32>,
    %c0_178 = arith.constant 0 : index
    %c88 = arith.constant 88 : index
    %c0_179 = arith.constant 0 : index
    %290 = vector.load %arg4[%c0_178, %c88, %c0_179] : memref<1x112x128xf32, #tpu.memory_space<vmem>>, vector<1x8x128xf32>
    %291 = vector.shape_cast %290 : vector<1x8x128xf32> to vector<8x128xf32>
    %292 = arith.addf %291, %210 : vector<8x128xf32>
    %c0_180 = arith.constant 0 : index
    %c88_181 = arith.constant 88 : index
    %c0_182 = arith.constant 0 : index
    %293 = vector.load %arg4[%c0_180, %c88_181, %c0_182] : memref<1x112x128xf32, #tpu.memory_space<vmem>>, vector<1x8x128xf32>
    %294 = vector.shape_cast %293 : vector<1x8x128xf32> to vector<8x128xf32>
    %295 = vector.shape_cast %292 : vector<8x128xf32> to vector<1x8x128xf32>
    tpu.vector_store %arg4[%c0_180, %c88_181, %c0_182], %295 {strides = array<i32>} : memref<1x112x128xf32, #tpu.memory_space<vmem>>, vector<1x8x128xf32>,
    %c0_183 = arith.constant 0 : index
    %c96 = arith.constant 96 : index
    %c0_184 = arith.constant 0 : index
    %296 = vector.load %arg4[%c0_183, %c96, %c0_184] : memref<1x112x128xf32, #tpu.memory_space<vmem>>, vector<1x8x128xf32>
    %297 = vector.shape_cast %296 : vector<1x8x128xf32> to vector<8x128xf32>
    %298 = arith.addf %297, %218 : vector<8x128xf32>
    %c0_185 = arith.constant 0 : index
    %c96_186 = arith.constant 96 : index
    %c0_187 = arith.constant 0 : index
    %299 = vector.load %arg4[%c0_185, %c96_186, %c0_187] : memref<1x112x128xf32, #tpu.memory_space<vmem>>, vector<1x8x128xf32>
    %300 = vector.shape_cast %299 : vector<1x8x128xf32> to vector<8x128xf32>
    %301 = vector.shape_cast %298 : vector<8x128xf32> to vector<1x8x128xf32>
    tpu.vector_store %arg4[%c0_185, %c96_186, %c0_187], %301 {strides = array<i32>} : memref<1x112x128xf32, #tpu.memory_space<vmem>>, vector<1x8x128xf32>,
    %c0_188 = arith.constant 0 : index
    %c104 = arith.constant 104 : index
    %c0_189 = arith.constant 0 : index
    %302 = vector.load %arg4[%c0_188, %c104, %c0_189] : memref<1x112x128xf32, #tpu.memory_space<vmem>>, vector<1x8x128xf32>
    %303 = vector.shape_cast %302 : vector<1x8x128xf32> to vector<8x128xf32>
    %304 = arith.addf %303, %223 : vector<8x128xf32>
    %c0_190 = arith.constant 0 : index
    %c104_191 = arith.constant 104 : index
    %c0_192 = arith.constant 0 : index
    %305 = vector.load %arg4[%c0_190, %c104_191, %c0_192] : memref<1x112x128xf32, #tpu.memory_space<vmem>>, vector<1x8x128xf32>
    %306 = vector.shape_cast %305 : vector<1x8x128xf32> to vector<8x128xf32>
    %307 = vector.shape_cast %304 : vector<8x128xf32> to vector<1x8x128xf32>
    tpu.vector_store %arg4[%c0_190, %c104_191, %c0_192], %307 {strides = array<i32>} : memref<1x112x128xf32, #tpu.memory_space<vmem>>, vector<1x8x128xf32>,
    return
  }
  func.func @transform_0(%arg0: i32, %arg1: i32) -> (i32, i32, i32) {
    %c1_i32 = arith.constant 1 : i32
    %0 = arith.muli %arg0, %c1_i32 : i32
    %1 = arith.addi %0, %arg1 : i32
    %c0_i32 = arith.constant 0 : i32
    %c0_i32_0 = arith.constant 0 : i32
    %c0_i32_1 = arith.constant 0 : i32
    return %c0_i32, %1, %c0_i32_0 : i32, i32, i32
  }
  func.func @transform_1(%arg0: i32, %arg1: i32) -> (i32, i32, i32) {
    %c1_i32 = arith.constant 1 : i32
    %0 = arith.muli %arg0, %c1_i32 : i32
    %1 = arith.addi %0, %arg1 : i32
    %c0_i32 = arith.constant 0 : i32
    %c0_i32_0 = arith.constant 0 : i32
    %c0_i32_1 = arith.constant 0 : i32
    return %c0_i32, %1, %c0_i32_0 : i32, i32, i32
  }
  func.func @transform_2(%arg0: i32, %arg1: i32) -> (i32, i32, i32) {
    %c0_i32 = arith.constant 0 : i32
    %c0_i32_0 = arith.constant 0 : i32
    %c0_i32_1 = arith.constant 0 : i32
    return %arg0, %c0_i32, %c0_i32_0 : i32, i32, i32
  }
}

</mosaic_0001>

<llo_original>
// kernel: _yolo_forward.1
$region0: #{_yolo_forward.1}
  #allocation0 [shape = 'u32[]', space=smem, size = 0x4, offset = 0x4, fixed_abs, tag = 'smem constant byte address 0x4 - core index']
  #allocation1 [shape = 'u32[144,128]{1,0:T(1,128)}', space=vmem, size = 0x12000, scoped, tag = 'internal scratch']
  %s0 = inlined_call_operand.vmem [shape: f32[5,16,128], index: 0, kind: input, shape index: {}]
  %s1 = inlined_call_operand.vmem [shape: f32[10,16,128], index: 1, kind: input, shape index: {}]
  %s2 = inlined_call_operand.vmem [shape: f32[1,112,128], index: 2, kind: output, shape index: {}]
  %s3 = sld [smem:[#allocation0]]
  $region22: #{_yolo_forward.1} parent=0
    _
  %s5 = ssub.s32 1, %s3
  %s6 = scalar_select 0, %s5, %s3
  // Predicated region
  $region2: #{_yolo_forward.1} parent=0 // pred_check
    _
  $region3: #{_yolo_forward.1} parent=0 // pred_check_branch
    %8 = sbr.rel (0) target = $region5
  $region4: #{_yolo_forward.1} parent=0 // pred_region
    %s9 = sadd.s32 0, 0
    %s10 = smul.u32 2, %s9
    %p11 = scmp.lt.s32.totalorder %s10, 1
    %s12 = scalar_select %p11, %s10, 1
    %s13 = smul.addr %s12, 8
    %s14 = scalar_lea.vmem %s0, %s13
    %s15 = sadd.s32 0, 0
    %s16 = smul.u32 2, %s15
  $region5: #{_yolo_forward.1} parent=0 // pred_fallthru
    _
  // Predicated region
  $region6: #{_yolo_forward.1} parent=0 // pred_check
    _
  $region7: #{_yolo_forward.1} parent=0 // pred_check_branch
    %18 = sbr.rel (0) target = $region9
  $region8: #{_yolo_forward.1} parent=0 // pred_region
    %s19 = sadd.s32 0, 0
    %s20 = smul.u32 2, %s19
    %p21 = scmp.lt.s32.totalorder %s20, 1
    %s22 = scalar_select %p21, %s20, 1
    %s23 = smul.addr %s22, 8
    %s24 = scalar_lea.vmem %s1, %s23
    %s25 = sadd.s32 0, 0
    %s26 = smul.u32 2, %s25
  $region9: #{_yolo_forward.1} parent=0 // pred_fallthru
    _
  %s27 = sadd.s32 0, 0
  %s28 = smul.u32 2, %s27
  %p29 = scmp.lt.s32.totalorder %s28, 1
  %s30 = scalar_select %p29, %s28, 1
  %s31 = smul.addr %s30, 8
  %s32 = scalar_lea.vmem %s0, %s31
  %s33 = sadd.s32 0, 0
  %s34 = smul.u32 2, %s33
  %p35 = scmp.lt.s32.totalorder %s34, 1
  %s36 = scalar_select %p35, %s34, 1
  %s37 = smul.addr %s36, 8
  %s38 = scalar_lea.vmem %s1, %s37
  %s39 = sadd.s32 0, 0
  %s40 = smul.u32 2, %s39
  %p41 = scmp.lt.s32.totalorder %s40, 1
  %s42 = scalar_select %p41, %s40, 1
  %s43 = smul.addr %s42, 8
  %s44 = scalar_lea.vmem %s0, %s43
  %s45 = sadd.s32 0, 0
  %s46 = smul.u32 2, %s45
  %s47 = sadd.s32 0, 0
  %s48 = smul.u32 2, %s47
  %p49 = scmp.lt.s32.totalorder %s48, 1
  %s50 = scalar_select %p49, %s48, 1
  %s51 = smul.addr %s50, 8
  %s52 = scalar_lea.vmem %s1, %s51
  %s53 = sadd.s32 0, 0
  %s54 = smul.u32 2, %s53
  %p55 = scmp.eq.s32.totalorder 0, 0
  // Predicated region
  $region10: #{_yolo_forward.1} parent=0 // pred_check
    %p56 = pneg %p55
  $region11: #{_yolo_forward.1} parent=0 // pred_check_branch
    %58 = sbr.rel (%p56) target = $region13
  $region12: #{_yolo_forward.1} parent=0 // pred_region
    %59 = vst [vmem:[%s2] sm:$0xff] 0.0
    %60 = vst [vmem:[%s2 + $0x8] sm:$0xff] 0.0
    %61 = vst [vmem:[%s2 + $0x10] sm:$0xff] 0.0
    %62 = vst [vmem:[%s2 + $0x18] sm:$0xff] 0.0
    %63 = vst [vmem:[%s2 + $0x20] sm:$0xff] 0.0
    %64 = vst [vmem:[%s2 + $0x28] sm:$0xff] 0.0
    %65 = vst [vmem:[%s2 + $0x30] sm:$0xff] 0.0
    %66 = vst [vmem:[%s2 + $0x38] sm:$0xff] 0.0
    %67 = vst [vmem:[%s2 + $0x40] sm:$0xff] 0.0
    %68 = vst [vmem:[%s2 + $0x48] sm:$0xff] 0.0
    %69 = vst [vmem:[%s2 + $0x50] sm:$0xff] 0.0
    %70 = vst [vmem:[%s2 + $0x58] sm:$0xff] 0.0
    %71 = vst [vmem:[%s2 + $0x60] sm:$0xff] 0.0
    %72 = vst [vmem:[%s2 + $0x68] sm:$0xff] 0.0
  $region13: #{_yolo_forward.1} parent=0 // pred_fallthru
    _
  %s73 = scalar_lea.vmem %s52, 96
  %v74 = vld [vmem:[%s73] sm:$0xff]
  %s75 = scalar_lea.vmem %s52, 112
  %v76 = vld [vmem:[%s75] sm:$0xff]
  %v77 = vadd.f32 %v74, 0.0
  %v78 = vadd.f32 %v76, 0.0
  %v79 = vld [vmem:[%s44] sm:$0xff]
  %v80 = vmul.f32 %v79, 0.125
  %v81 = vld [vmem:[%s52] sm:$0xff]
  %v82 = vadd.f32 %v80, %v81
  %v83 = vmul.f32 %v74, %v82
  %v84 = vmul.f32 %v83, %v82
  %v85 = vadd.f32 %v84, 0.0
  %s86 = scalar_lea.vmem %s44, 16
  %v87 = vld [vmem:[%s86] sm:$0xff]
  %v88 = vmul.f32 %v87, 0.125
  %s89 = scalar_lea.vmem %s52, 16
  %v90 = vld [vmem:[%s89] sm:$0xff]
  %v91 = vadd.f32 %v88, %v90
  %v92 = vmul.f32 %v74, %v91
  %v93 = vmul.f32 %v92, %v91
  %v94 = vadd.f32 %v93, 0.0
  %vm95 = vcmp.gt.f32.partialorder %v74, 0.0
  %s96 = scalar_lea.vmem %s44, 32
  %v97 = vld [vmem:[%s96] sm:$0xff]
  %v98 = vsel %vm95, %v97, 1.0
  %v99 = vrsqrt.pop %v98
  %v100 = vmul.f32 %v98, %v99
  %vm101 = vcmp.eq.f32.partialorder %v98, inf
  %v102 = vsel %vm101, %v98, %v100
  %vm103 = vcmp.eq.f32.partialorder %v98, 0.0
  %v104 = vand.u32 %v98, 2147483648
  %v105 = vsel %vm103, %v104, %v102
  %s106 = scalar_lea.vmem %s52, 32
  %v107 = vld [vmem:[%s106] sm:$0xff]
  %v108 = vmul.f32 %v105, %v107
  %s109 = scalar_lea.vmem %s52, 48
  %v110 = vld [vmem:[%s109] sm:$0xff]
  %v111 = vsub.f32 %v108, %v110
  %v112 = vmul.f32 %v74, %v111
  %v113 = vmul.f32 %v112, %v111
  %v114 = vadd.f32 %v113, 0.0
  %s115 = scalar_lea.vmem %s44, 48
  %v116 = vld [vmem:[%s115] sm:$0xff]
  %v117 = vsel %vm95, %v116, 1.0
  %v118 = vrsqrt.pop %v117
  %v119 = vmul.f32 %v117, %v118
  %vm120 = vcmp.eq.f32.partialorder %v117, inf
  %v121 = vsel %vm120, %v117, %v119
  %vm122 = vcmp.eq.f32.partialorder %v117, 0.0
  %v123 = vand.u32 %v117, 2147483648
  %v124 = vsel %vm122, %v123, %v121
  %s125 = scalar_lea.vmem %s52, 64
  %v126 = vld [vmem:[%s125] sm:$0xff]
  %v127 = vmul.f32 %v124, %v126
  %s128 = scalar_lea.vmem %s52, 80
  %v129 = vld [vmem:[%s128] sm:$0xff]
  %v130 = vsub.f32 %v127, %v129
  %v131 = vmul.f32 %v74, %v130
  %v132 = vmul.f32 %v131, %v130
  %v133 = vadd.f32 %v132, 0.0
  %s134 = scalar_lea.vmem %s44, 64
  %v135 = vld [vmem:[%s134] sm:$0xff]
  %v136 = vsel %vm95, %v135, 0.5
  %vm137 = vcmp.gt.f32.partialorder %v76, 0.0
  %v138 = vsel %vm137, %v135, 0.5
  %v139 = vlog2.pop %v136
  %v140 = vmul.f32 %v139, 0.6931472
  %v141 = vmax.f32 %v140, -100.0
  %v142 = vsub.f32 0.0, %v141
  %v143 = vmul.f32 %v74, %v142
  %v144 = vadd.f32 %v143, 0.0
  %v145 = vsub.f32 1.0, %v138
  %v146 = vlog2.pop %v145
  %v147 = vmul.f32 %v146, 0.6931472
  %v148 = vmax.f32 %v147, -100.0
  %v149 = vsub.f32 0.0, %v148
  %v150 = vmul.f32 %v76, %v149
  %v151 = vadd.f32 %v150, 0.0
  %s152 = scalar_lea.vmem %s52, 128
  %v153 = vld [vmem:[%s152] sm:$0xff]
  %v154 = vmul.f32 %v74, %v153
  %v155 = vadd.f32 %v154, 0.0
  %v156 = vmul.f32 %v74, %v135
  %v157 = vadd.f32 %v156, 0.0
  %v158 = vmul.f32 %v76, %v135
  %v159 = vadd.f32 %v158, 0.0
  %vm160 = vcmp.gt.f32.partialorder %v135, 0.5
  %v161 = vsel %vm160, 1, 0
  %v162 = vcvt.s32.f32 %v161
  %v163 = vadd.f32 %v162, 0.0
  %v164 = vmul.f32 %v162, %v153
  %s165 = scalar_lea.vmem %s52, 144
  %v166 = vld [vmem:[%s165] sm:$0xff]
  %vm167 = vcmp.gt.f32.partialorder %v166, 0.5
  %v168 = vsel %vm167, %v164, 0.0
  %v169 = vadd.f32 %v168, 0.0
  %vm170 = vcmp.gt.f32.partialorder %v166, 0.75
  %v171 = vsel %vm170, %v164, 0.0
  %v172 = vadd.f32 %v171, 0.0
  %v173 = vld [vmem:[%s73 + $0x8] sm:$0xff]
  %v174 = vld [vmem:[%s75 + $0x8] sm:$0xff]
  %v175 = vadd.f32 %v77, %v173
  %v176 = vadd.f32 %v78, %v174
  %v177 = vld [vmem:[%s44 + $0x8] sm:$0xff]
  %v178 = vmul.f32 %v177, 0.125
  %v179 = vld [vmem:[%s52 + $0x8] sm:$0xff]
  %v180 = vadd.f32 %v178, %v179
  %v181 = vmul.f32 %v173, %v180
  %v182 = vmul.f32 %v181, %v180
  %v183 = vadd.f32 %v85, %v182
  %v184 = vld [vmem:[%s86 + $0x8] sm:$0xff]
  %v185 = vmul.f32 %v184, 0.125
  %v186 = vld [vmem:[%s89 + $0x8] sm:$0xff]
  %v187 = vadd.f32 %v185, %v186
  %v188 = vmul.f32 %v173, %v187
  %v189 = vmul.f32 %v188, %v187
  %v190 = vadd.f32 %v94, %v189
  %vm191 = vcmp.gt.f32.partialorder %v173, 0.0
  %v192 = vld [vmem:[%s96 + $0x8] sm:$0xff]
  %v193 = vsel %vm191, %v192, 1.0
  %v194 = vrsqrt.pop %v193
  %v195 = vmul.f32 %v193, %v194
  %vm196 = vcmp.eq.f32.partialorder %v193, inf
  %v197 = vsel %vm196, %v193, %v195
  %vm198 = vcmp.eq.f32.partialorder %v193, 0.0
  %v199 = vand.u32 %v193, 2147483648
  %v200 = vsel %vm198, %v199, %v197
  %v201 = vld [vmem:[%s106 + $0x8] sm:$0xff]
  %v202 = vmul.f32 %v200, %v201
  %v203 = vld [vmem:[%s109 + $0x8] sm:$0xff]
  %v204 = vsub.f32 %v202, %v203
  %v205 = vmul.f32 %v173, %v204
  %v206 = vmul.f32 %v205, %v204
  %v207 = vadd.f32 %v114, %v206
  %v208 = vld [vmem:[%s115 + $0x8] sm:$0xff]
  %v209 = vsel %vm191, %v208, 1.0
  %v210 = vrsqrt.pop %v209
  %v211 = vmul.f32 %v209, %v210
  %vm212 = vcmp.eq.f32.partialorder %v209, inf
  %v213 = vsel %vm212, %v209, %v211
  %vm214 = vcmp.eq.f32.partialorder %v209, 0.0
  %v215 = vand.u32 %v209, 2147483648
  %v216 = vsel %vm214, %v215, %v213
  %v217 = vld [vmem:[%s125 + $0x8] sm:$0xff]
  %v218 = vmul.f32 %v216, %v217
  %v219 = vld [vmem:[%s128 + $0x8] sm:$0xff]
  %v220 = vsub.f32 %v218, %v219
  %v221 = vmul.f32 %v173, %v220
  %v222 = vmul.f32 %v221, %v220
  %v223 = vadd.f32 %v133, %v222
  %v224 = vld [vmem:[%s134 + $0x8] sm:$0xff]
  %v225 = vsel %vm191, %v224, 0.5
  %vm226 = vcmp.gt.f32.partialorder %v174, 0.0
  %v227 = vsel %vm226, %v224, 0.5
  %v228 = vlog2.pop %v225
  %v229 = vmul.f32 %v228, 0.6931472
  %v230 = vmax.f32 %v229, -100.0
  %v231 = vsub.f32 0.0, %v230
  %v232 = vmul.f32 %v173, %v231
  %v233 = vadd.f32 %v144, %v232
  %v234 = vsub.f32 1.0, %v227
  %v235 = vlog2.pop %v234
  %v236 = vmul.f32 %v235, 0.6931472
  %v237 = vmax.f32 %v236, -100.0
  %v238 = vsub.f32 0.0, %v237
  %v239 = vmul.f32 %v174, %v238
  %v240 = vadd.f32 %v151, %v239
  %v241 = vld [vmem:[%s152 + $0x8] sm:$0xff]
  %v242 = vmul.f32 %v173, %v241
  %v243 = vadd.f32 %v155, %v242
  %v244 = vmul.f32 %v173, %v224
  %v245 = vadd.f32 %v157, %v244
  %v246 = vmul.f32 %v174, %v224
  %v247 = vadd.f32 %v159, %v246
  %vm248 = vcmp.gt.f32.partialorder %v224, 0.5
  %v249 = vsel %vm248, 1, 0
  %v250 = vcvt.s32.f32 %v249
  %v251 = vadd.f32 %v163, %v250
  %v252 = vmul.f32 %v250, %v241
  %v253 = vld [vmem:[%s165 + $0x8] sm:$0xff]
  %vm254 = vcmp.gt.f32.partialorder %v253, 0.5
  %v255 = vsel %vm254, %v252, 0.0
  %v256 = vadd.f32 %v169, %v255
  %vm257 = vcmp.gt.f32.partialorder %v253, 0.75
  %v258 = vsel %vm257, %v252, 0.0
  %v259 = vadd.f32 %v172, %v258
  %v260 = vld [vmem:[%s2] sm:$0xff]
  %v261 = vadd.f32 %v260, %v175
  %262 = vst [vmem:[%s2] sm:$0xff] %v261
  %v263 = vld [vmem:[%s2 + $0x8] sm:$0xff]
  %v264 = vadd.f32 %v263, %v176
  %265 = vst [vmem:[%s2 + $0x8] sm:$0xff] %v264
  %v266 = vld [vmem:[%s2 + $0x10] sm:$0xff]
  %v267 = vadd.f32 %v266, %v183
  %268 = vst [vmem:[%s2 + $0x10] sm:$0xff] %v267
  %v269 = vld [vmem:[%s2 + $0x18] sm:$0xff]
  %v270 = vadd.f32 %v269, %v190
  %271 = vst [vmem:[%s2 + $0x18] sm:$0xff] %v270
  %v272 = vld [vmem:[%s2 + $0x20] sm:$0xff]
  %v273 = vadd.f32 %v272, %v207
  %274 = vst [vmem:[%s2 + $0x20] sm:$0xff] %v273
  %v275 = vld [vmem:[%s2 + $0x28] sm:$0xff]
  %v276 = vadd.f32 %v275, %v223
  %277 = vst [vmem:[%s2 + $0x28] sm:$0xff] %v276
  %v278 = vld [vmem:[%s2 + $0x30] sm:$0xff]
  %v279 = vadd.f32 %v278, %v233
  %280 = vst [vmem:[%s2 + $0x30] sm:$0xff] %v279
  %v281 = vld [vmem:[%s2 + $0x38] sm:$0xff]
  %v282 = vadd.f32 %v281, %v240
  %283 = vst [vmem:[%s2 + $0x38] sm:$0xff] %v282
  %v284 = vld [vmem:[%s2 + $0x40] sm:$0xff]
  %v285 = vadd.f32 %v284, %v243
  %286 = vst [vmem:[%s2 + $0x40] sm:$0xff] %v285
  %v287 = vld [vmem:[%s2 + $0x48] sm:$0xff]
  %v288 = vadd.f32 %v287, %v245
  %289 = vst [vmem:[%s2 + $0x48] sm:$0xff] %v288
  %v290 = vld [vmem:[%s2 + $0x50] sm:$0xff]
  %v291 = vadd.f32 %v290, %v247
  %292 = vst [vmem:[%s2 + $0x50] sm:$0xff] %v291
  %v293 = vld [vmem:[%s2 + $0x58] sm:$0xff]
  %v294 = vadd.f32 %v293, %v251
  %295 = vst [vmem:[%s2 + $0x58] sm:$0xff] %v294
  %v296 = vld [vmem:[%s2 + $0x60] sm:$0xff]
  %v297 = vadd.f32 %v296, %v256
  %298 = vst [vmem:[%s2 + $0x60] sm:$0xff] %v297
  %v299 = vld [vmem:[%s2 + $0x68] sm:$0xff]
  %v300 = vadd.f32 %v299, %v259
  %301 = vst [vmem:[%s2 + $0x68] sm:$0xff] %v300
  // Predicated region
  $region14: #{_yolo_forward.1} parent=0 // pred_check
    _
  $region15: #{_yolo_forward.1} parent=0 // pred_check_branch
    %303 = sbr.rel (0) target = $region17
  $region16: #{_yolo_forward.1} parent=0 // pred_region
    _
  $region17: #{_yolo_forward.1} parent=0 // pred_fallthru
    _
  // Predicated region
  $region18: #{_yolo_forward.1} parent=0 // pred_check
    _
  $region19: #{_yolo_forward.1} parent=0 // pred_check_branch
    %305 = sbr.rel (0) target = $region21
  $region20: #{_yolo_forward.1} parent=0 // pred_region
    _
  $region21: #{_yolo_forward.1} parent=0 // pred_fallthru
    _

</llo_original>
